<compile_context>
chip_gen: v5e
topology: v5e:2x2
jax: 0.10.0
libtpu: 0.0.40
codegen_flags: <defaults>
</compile_context>

<pallas_src>
import jax
import jax.numpy as jnp
from jax.experimental import pallas as pl
from jax.experimental.pallas import tpu as pltpu


def classifier_kernel(x_ref, w_ref, b_ref, o_ref):
    # x_ref: (TN, C, HW)   w_ref: (C, Kp) [already scaled by 1/HW]
    # b_ref: (1, Kp)       o_ref: (TN, Kp)
    x = x_ref[...].astype(jnp.float32)                    # f32 accumulation (bf16-safe)
    pooled = jnp.sum(x, axis=-1)                          # lane reduce over HW -> (TN, C)
    out = jnp.dot(pooled, w_ref[...],
                  preferred_element_type=jnp.float32)     # (TN, Kp) on the MXU
    o_ref[...] = (out + b_ref[...]).astype(o_ref.dtype)   # broadcast bias


def _pick_batch_tile(N, HW, C, itemsize, target_bytes=6 * 1024 * 1024):
    """Batch tile targeting ~6 MiB input blocks (85%+ of HBM roofline, fits
    double-buffered inside the 16/32 MiB scoped VMEM defaults)."""
    per_sample = HW * C * itemsize
    tn = max(1, target_bytes // per_sample)
    if tn >= N:
        return N
    tn = max(8, (tn // 8) * 8)      # keep sublane-friendly multiples of 8
    return min(tn, N)


def classifier_forward(x_nchw, weight, bias):
    """x_nchw: (N, C, H, W); weight: (num_classes, C) [PyTorch layout]; bias: (num_classes,).

    Activations may be f32 or bf16; parameters are promoted to f32.
    """
    N, C, H, W = x_nchw.shape
    K = weight.shape[0]
    HW = H * W

    # Free (layout-only) merge of the trailing spatial dims: (N, C, HW).
    x_flat = x_nchw.reshape(N, C, HW)

    # Fold the 1/(H*W) pooling scale into the weight; pad K up to a lane-dense
    # multiple of 128 (zeros contribute nothing; sliced off after the call).
    Kp = max(128, ((K + 127) // 128) * 128)
    w_scaled = (weight.T.astype(jnp.float32)) / jnp.float32(HW)        # (C, K)
    w_p = jnp.zeros((C, Kp), jnp.float32).at[:, :K].set(w_scaled)      # (C, Kp)
    b_p = jnp.zeros((1, Kp), jnp.float32).at[:, :K].set(
        bias.astype(jnp.float32))                                      # (1, Kp)

    TN = _pick_batch_tile(N, HW, C, jnp.dtype(x_flat.dtype).itemsize)
    grid = (pl.cdiv(N, TN),)

    out_p = pl.pallas_call(
        classifier_kernel,
        out_shape=jax.ShapeDtypeStruct((N, Kp), jnp.float32),
        grid_spec=pltpu.PrefetchScalarGridSpec(
            num_scalar_prefetch=0,
            grid=grid,
            in_specs=[
                pl.BlockSpec((TN, C, HW), lambda i: (i, 0, 0)),   # streamed batch tiles
                pl.BlockSpec((C, Kp), lambda i: (0, 0)),          # weight: VMEM-resident
                pl.BlockSpec((1, Kp), lambda i: (0, 0)),          # bias:   VMEM-resident
            ],
            out_specs=pl.BlockSpec((TN, Kp), lambda i: (i, 0)),
        ),
        compiler_params=pltpu.CompilerParams(
            dimension_semantics=("parallel",),   # batch axis shards across TCs (v7x)
        ),
    )(x_flat, w_p, b_p)

    return out_p[:, :K]


if __name__ == "__main__":
    # Small shapes consistent with the module: batch=2, inplanes=8, spatial=16x16, classes=10
    N, C, H, W = 2, 8, 16, 16
    num_classes = 10

    key = jax.random.PRNGKey(0)
    kx, kw, kb = jax.random.split(key, 3)

    x = jax.random.normal(kx, (N, C, H, W), dtype=jnp.float32)
    # Mimic PyTorch Linear init: uniform(-1/sqrt(C), 1/sqrt(C))
    bound = 1.0 / jnp.sqrt(jnp.float32(C))
    weight = jax.random.uniform(kw, (num_classes, C), minval=-bound, maxval=bound,
                                dtype=jnp.float32)
    bias = jax.random.uniform(kb, (num_classes,), minval=-bound, maxval=bound,
                              dtype=jnp.float32)

    out = classifier_forward(x, weight, bias)
    out = jax.block_until_ready(out)

    # Reference in plain JAX: avgpool -> flatten -> linear
    ref = jnp.mean(x, axis=(2, 3)) @ weight.T + bias
    assert out.shape == (N, num_classes)
    assert jnp.allclose(out, ref, atol=1e-5, rtol=1e-5), "mismatch vs reference"

    print("KERNEL_OK")
</pallas_src>

<mosaic_0001>
module attributes {stable_mosaic.version = 11 : i64} {
  func.func @classifier_kernel(%arg0: i32, %arg1: memref<2x8x256xf32, #tpu.memory_space<vmem>>, %arg2: memref<8x128xf32, #tpu.memory_space<vmem>>, %arg3: memref<1x128xf32, #tpu.memory_space<vmem>>, %arg4: memref<2x128xf32, #tpu.memory_space<vmem>>) attributes {dimension_semantics = [#tpu.dimension_semantics<parallel>], iteration_bounds = array<i64: 1>, scalar_prefetch = 0 : i64, scratch_operands = 0 : i64, tpu.core_type = #tpu.core_type<tc>, window_params = [{transform_indices = @transform_0, window_bounds = array<i64: 2, 8, 256>}, {pipeline_mode = #tpu.pipeline_mode<synchronous>, transform_indices = @transform_1, window_bounds = array<i64: 8, 128>}, {pipeline_mode = #tpu.pipeline_mode<synchronous>, transform_indices = @transform_2, window_bounds = array<i64: 1, 128>}, {transform_indices = @transform_3, window_bounds = array<i64: 2, 128>}]} {
    %c0 = arith.constant 0 : index
    %c0_0 = arith.constant 0 : index
    %c0_1 = arith.constant 0 : index
    %0 = vector.load %arg1[%c0, %c0_0, %c0_1] : memref<2x8x256xf32, #tpu.memory_space<vmem>>, vector<2x8x256xf32>
    %cst = arith.constant dense<0.000000e+00> : vector<2x8xf32>
    %1 = vector.multi_reduction <add>, %0, %cst [2] : vector<2x8x256xf32> to vector<2x8xf32>
    %c0_2 = arith.constant 0 : index
    %c0_3 = arith.constant 0 : index
    %2 = vector.load %arg2[%c0_2, %c0_3] : memref<8x128xf32, #tpu.memory_space<vmem>>, vector<8x128xf32>
    %cst_4 = arith.constant dense<0.000000e+00> : vector<2x128xf32>
    %3 = tpu.matmul %1, %2, %cst_4 {dimension_numbers = #tpu.dot_dimension_numbers<[1], [0], [0], [1], [0, 0, 1, 1], [], []>} : vector<2x8xf32>, vector<8x128xf32>, vector<2x128xf32> -> vector<2x128xf32>
    %c0_5 = arith.constant 0 : index
    %c0_6 = arith.constant 0 : index
    %4 = vector.load %arg3[%c0_5, %c0_6] : memref<1x128xf32, #tpu.memory_space<vmem>>, vector<1x128xf32>
    %5 = vector.broadcast %4 : vector<1x128xf32> to vector<2x128xf32>
    %6 = arith.addf %3, %5 : vector<2x128xf32>
    %c0_7 = arith.constant 0 : index
    %c0_8 = arith.constant 0 : index
    %7 = vector.load %arg4[%c0_7, %c0_8] : memref<2x128xf32, #tpu.memory_space<vmem>>, vector<2x128xf32>
    tpu.vector_store %arg4[%c0_7, %c0_8], %6 {strides = array<i32>} : memref<2x128xf32, #tpu.memory_space<vmem>>, vector<2x128xf32>,
    return
  }
  func.func @transform_0(%arg0: i32) -> (i32, i32, i32) {
    %c0_i32 = arith.constant 0 : i32
    %c0_i32_0 = arith.constant 0 : i32
    %c0_i32_1 = arith.constant 0 : i32
    return %arg0, %c0_i32, %c0_i32_0 : i32, i32, i32
  }
  func.func @transform_1(%arg0: i32) -> (i32, i32) {
    %c0_i32 = arith.constant 0 : i32
    %c0_i32_0 = arith.constant 0 : i32
    %c0_i32_1 = arith.constant 0 : i32
    return %c0_i32, %c0_i32_0 : i32, i32
  }
  func.func @transform_2(%arg0: i32) -> (i32, i32) {
    %c0_i32 = arith.constant 0 : i32
    %c0_i32_0 = arith.constant 0 : i32
    %c0_i32_1 = arith.constant 0 : i32
    return %c0_i32, %c0_i32_0 : i32, i32
  }
  func.func @transform_3(%arg0: i32) -> (i32, i32) {
    %c0_i32 = arith.constant 0 : i32
    %c0_i32_0 = arith.constant 0 : i32
    return %arg0, %c0_i32 : i32, i32
  }
}

</mosaic_0001>

<llo_original>
// kernel: tpu_custom_call.1
$region0: #{tpu_custom_call.1}
  #allocation0 [shape = 'u32[]', space=smem, size = 0x4, offset = 0x4, fixed_abs, tag = 'smem constant byte address 0x4 - core index']
  #allocation1 [shape = 'u32[72,128]{1,0:T(1,128)}', space=vmem, size = 0x9000, scoped, tag = 'internal scratch']
  %s0 = inlined_call_operand.hbm [shape: f32[2,8,256], index: 0, kind: input, shape index: {}]
  %s1 = inlined_call_operand.hbm [shape: f32[8,128], index: 1, kind: input, shape index: {}]
  %s2 = inlined_call_operand.vmem [shape: f32[1,128], index: 2, kind: input, shape index: {}]
  %s3 = inlined_call_operand.hbm [shape: f32[2,128], index: 3, kind: output, shape index: {}]
  %s4 = sld [smem:[#allocation0]]
  $region30: #{tpu_custom_call.1} parent=0
    _
  %s6 = ssub.s32 1, %s4
  %s7 = scalar_select 0, %s6, %s4
  $region1: #{tpu_custom_call.1} parent=0
    #allocation2 [shape = 'u8[16384]{0}', space=vmem, size = 0x4000, scoped, tag = 'input window, operand 0, single buffered']
    #allocation3 [shape = 's32[1]{0}', space=sflag, size = 0x4, scoped, tag = 'scoped memory for tpu_custom_call.1']
    #allocation4 [shape = 's32[1]{0}', space=sflag, size = 0x4, scoped, tag = 'scoped memory for tpu_custom_call.1']
    #allocation5 [shape = 'u8[4096]{0}', space=vmem, size = 0x1000, scoped, tag = 'input window, operand 1, single buffered']
    #allocation6 [shape = 's32[1]{0}', space=sflag, size = 0x4, scoped, tag = 'scoped memory for tpu_custom_call.1']
    #allocation7 [shape = 'u8[1024]{0}', space=vmem, size = 0x400, scoped, tag = 'output window, operand 0, single buffered']
    %8 = vsyncpa [#allocation3], 0
    %9 = vsyncpa [#allocation6], 0
    %10 = vsyncpa [#allocation4], 0
    // Predicated region
    $region2: #{tpu_custom_call.1} parent=1 // pred_check
      _
    $region3: #{tpu_custom_call.1} parent=1 // pred_check_branch
      %12 = sbr.rel (0) target = $region5
    $region4: #{tpu_custom_call.1} parent=1 // pred_region
      %14 = vsyncadd [#allocation3], 0
      %s15 = sshll.u32 %s0, 4
      %s16 = int_to_ptr.hbm [resolvable:$true] %s15
      %s17 = sshll.u32 [#allocation2], 4
      %s18 = int_to_ptr.vmem [resolvable:$true] %s17
      %23 = dma.hbm_to_vmem [thread:$0]  %s16, 512, %s18, [#allocation3], 256, 256, 16
    $region5: #{tpu_custom_call.1} parent=1 // pred_fallthru
      _
    // Predicated region
    $region6: #{tpu_custom_call.1} parent=1 // pred_check
      _
    $region7: #{tpu_custom_call.1} parent=1 // pred_check_branch
      %25 = sbr.rel (0) target = $region9
    $region8: #{tpu_custom_call.1} parent=1 // pred_region
      %27 = vsyncadd [#allocation6], 0
      %s29 = sshll.u32 %s1, 4
      %s30 = int_to_ptr.hbm [resolvable:$true] %s29
      %s31 = sshll.u32 [#allocation5], 4
      %s32 = int_to_ptr.vmem [resolvable:$true] %s31
      %34 = dma.hbm_to_vmem [thread:$0]  %s30, 128, %s32, [#allocation6]
    $region9: #{tpu_custom_call.1} parent=1 // pred_fallthru
      _
    // Predicated region
    $region10: #{tpu_custom_call.1} parent=1 // pred_check
      _
    $region11: #{tpu_custom_call.1} parent=1 // pred_check_branch
      %36 = sbr.rel (0) target = $region13
    $region12: #{tpu_custom_call.1} parent=1 // pred_region
      _
    $region13: #{tpu_custom_call.1} parent=1 // pred_fallthru
      _
    // Predicated region
    $region14: #{tpu_custom_call.1} parent=1 // pred_check
      _
    $region15: #{tpu_custom_call.1} parent=1 // pred_check_branch
      %38 = sbr.rel (0) target = $region17
    $region16: #{tpu_custom_call.1} parent=1 // pred_region
      %40 = dma.done [#allocation3], 512
    $region17: #{tpu_custom_call.1} parent=1 // pred_fallthru
      _
    // Predicated region
    $region18: #{tpu_custom_call.1} parent=1 // pred_check
      _
    $region19: #{tpu_custom_call.1} parent=1 // pred_check_branch
      %42 = sbr.rel (0) target = $region21
    $region20: #{tpu_custom_call.1} parent=1 // pred_region
      %44 = dma.done [#allocation6], 128
    $region21: #{tpu_custom_call.1} parent=1 // pred_fallthru
      _
    %v45 = vld [vmem:[#allocation2] sm:$0xff]
    %v46 = vld [vmem:[#allocation2 + $0x8] sm:$0xff]
    %v47 = vld [vmem:[#allocation2 + $0x10] sm:$0xff]
    %v48 = vld [vmem:[#allocation2 + $0x18] sm:$0xff]
    %v49 = vadd.f32 %v45, %v46
    %50 = vadd.xlane.f32.xlu0 %v49
    %v51 = vpop.xlane.xlu0 %50
    %v52 = vadd.f32 %v47, %v48
    %53 = vadd.xlane.f32.xlu0 %v52
    %v54 = vpop.xlane.xlu0 %53
    %v55 = vld [vmem:[#allocation5] sm:$0xff]
    %v56 = vld [vmem:[%s2] sm:$0x1]
    %v58 = vperm.slane %v56, 0
    %v62 = vlaneseq
    %v63 = vand.u32 %v62, 127
    %v64 = vperm.slane %v51, %v63
    %v65 = vperm.slane %v54, %v63
    %vm66 = vcmask 1041409
    %v67 = vsel %vm66, %v65, %v64
    %vm68 = vcmask 64512
    %v69 = vsel %vm68, %v67, 0
    %71 = vmatpush.msra.mxu0 0.0
    %72 = vmatpush.msra.mxu0 0.0
    %73 = vmatpush.msra.mxu0 0.0
    %74 = vmatpush.msra.mxu0 0.0
    %75 = vmatpush.msra.mxu0 0.0
    %76 = vmatpush.msra.mxu0 0.0
    %77 = vmatpush.msra.mxu0 0.0
    %78 = vmatpush.msra.mxu0 0.0
    %79 = vmatpush.msra.mxu0 0.0
    %80 = vmatpush.msra.mxu0 0.0
    %81 = vmatpush.msra.mxu0 0.0
    %82 = vmatpush.msra.mxu0 0.0
    %83 = vmatpush.msra.mxu0 0.0
    %84 = vmatpush.msra.mxu0 0.0
    %85 = vmatpush.msra.mxu0 0.0
    %86 = vmatpush.msra.mxu0 %v55
    %87 = vmatmul.f32.gmra.mxu0 %v69
    %v88 = vpop.f32.mrf.mxu0
    %v89 = vadd.f32 %v58, %v88
    %90 = vdwg.mxu0
    %91 = vst [vmem:[#allocation7] sm:$0x3] %v89
    // Predicated region
    $region22: #{tpu_custom_call.1} parent=1 // pred_check
      _
    $region23: #{tpu_custom_call.1} parent=1 // pred_check_branch
      %93 = sbr.rel (0) target = $region25
    $region24: #{tpu_custom_call.1} parent=1 // pred_region
      %95 = vsyncadd [#allocation4], 0
      %s97 = sshll.u32 [#allocation7], 4
      %s98 = int_to_ptr.vmem [resolvable:$true] %s97
      %s99 = sshll.u32 %s3, 4
      %s100 = int_to_ptr.hbm [resolvable:$true] %s99
      %102 = dma.vmem_to_hbm [thread:$0]  %s98, 32, %s100, [#allocation4]
    $region25: #{tpu_custom_call.1} parent=1 // pred_fallthru
      _
    // Predicated region
    $region26: #{tpu_custom_call.1} parent=1 // pred_check
      _
    $region27: #{tpu_custom_call.1} parent=1 // pred_check_branch
      %104 = sbr.rel (0) target = $region29
    $region28: #{tpu_custom_call.1} parent=1 // pred_region
      %106 = dma.done [#allocation4], 32
    $region29: #{tpu_custom_call.1} parent=1 // pred_fallthru
      _
    %107 = vsyncpa [#allocation3], 1
    %108 = vsyncpa [#allocation6], 1
    %109 = vsyncpa [#allocation4], 1

</llo_original>
